<compile_context>
chip_gen: v6e
topology: v6e:2x2x1
jax: 0.10.0
libtpu: 0.0.40
codegen_flags: <defaults>
</compile_context>

<pallas_src>
import math
from functools import partial

import jax
import jax.numpy as jnp
from jax.experimental import pallas as pl
from jax.experimental.pallas import tpu as pltpu


def decoder_kernel(x_ref, state_ref, wb_ref, out_ref):
    """x_ref: (1,1) SMEM; state_ref: (8,H) VMEM; wb_ref: (6H+16, 4H) VMEM;
    out_ref: (8,H) VMEM (rows 0-2 h_n, 3-5 c_n, row 6 = y padded, row 7 = 0)."""
    f32 = jnp.float32
    H = state_ref.shape[1]
    b_off = 6 * H + 8                      # first bias row in the slab (8-aligned)

    x = x_ref[0, 0]                        # scalar decoder input

    state = state_ref[...]                 # (8, H) single load
    biases = wb_ref[b_off:b_off + 8, :]    # (8, 4H) single aligned load

    def lstm_cell(gates, c_prev):
        # One sigmoid + one tanh over the full (1, 4H) vreg, then slice chunks.
        sig = jax.nn.sigmoid(gates)
        tg = jnp.tanh(gates)
        i_g = sig[:, 0:H]                  # PyTorch gate order: i, f, g, o
        f_g = sig[:, H:2 * H]
        g_g = tg[:, 2 * H:3 * H]
        o_g = sig[:, 3 * H:4 * H]
        c_new = f_g * c_prev + i_g * g_g
        h_new = o_g * jnp.tanh(c_new)
        return h_new, c_new

    # ---------------- layer 0 (input_size = 1: scalar * weight row) --------
    h_prev = state[0:1, :]
    c_prev = state[3:4, :]
    gates = (x * wb_ref[6 * H:6 * H + 1, :]
             + jnp.dot(h_prev, wb_ref[0:H, :], preferred_element_type=f32)
             + biases[0:1, :])
    h0, c0 = lstm_cell(gates, c_prev)

    # ---------------- layer 1 (fused [wih1^T ; whh1^T] matmul) -------------
    h_prev = state[1:2, :]
    c_prev = state[4:5, :]
    lhs = jnp.concatenate([h0, h_prev], axis=1)               # (1, 2H)
    gates = (jnp.dot(lhs, wb_ref[H:3 * H, :], preferred_element_type=f32)
             + biases[1:2, :])
    h1, c1 = lstm_cell(gates, c_prev)

    # ---------------- layer 2 (fused [wih2^T ; whh2^T] matmul) -------------
    h_prev = state[2:3, :]
    c_prev = state[5:6, :]
    lhs = jnp.concatenate([h1, h_prev], axis=1)               # (1, 2H)
    gates = (jnp.dot(lhs, wb_ref[3 * H:5 * H, :], preferred_element_type=f32)
             + biases[2:3, :])
    h2, c2 = lstm_cell(gates, c_prev)

    # ---------------- output layer: Linear(H, n_features) ------------------
    # out_w^T / out_b are zero-padded to 4H lanes host-side, so lanes beyond
    # n_features are exactly zero.
    y_full = (jnp.dot(h2, wb_ref[5 * H:6 * H, :], preferred_element_type=f32)
              + biases[3:4, :])                               # (1, 4H)
    y_row = y_full[:, 0:H]                                    # (1, H)

    # Single store of the whole result slab.
    out_ref[...] = jnp.concatenate(
        [h0, h1, h2, c0, c1, c2, y_row, jnp.zeros_like(y_row)], axis=0)


def init_params(key, H, n_features=1):
    """Deterministic synthetic parameters matching the nn.Module's shapes."""
    bound = 1.0 / math.sqrt(H)

    def u(k, shape):
        return jax.random.uniform(k, shape, jnp.float32, -bound, bound)

    ks = jax.random.split(key, 14)
    in_sizes = [1, H, H]                      # LSTM input_size per layer
    params = {}
    i = 0
    for l in range(3):
        params[f"wih{l}"] = u(ks[i], (4 * H, in_sizes[l])); i += 1
        params[f"whh{l}"] = u(ks[i], (4 * H, H)); i += 1
        params[f"bih{l}"] = u(ks[i], (4 * H,)); i += 1
        params[f"bhh{l}"] = u(ks[i], (4 * H,)); i += 1
    params["out_w"] = u(ks[i], (n_features, H)); i += 1
    params["out_b"] = u(ks[i], (n_features,)); i += 1
    return params


def pack_weights(params, H, n_features):
    """Pack all Decoder parameters into one (6H+16, 4H) f32 slab.

    Row layout (all block starts 8-sublane aligned; requires H % 8 == 0):
      [0     :  H )   whh0^T
      [H     : 3H )   [wih1^T ; whh1^T]   (fused per-layer gate weight)
      [3H    : 5H )   [wih2^T ; whh2^T]
      [5H    : 6H )   out_w^T zero-padded from (H, nf) to (H, 4H)
      [6H    : 6H+8)  row 6H = wih0^T (the x weight row), rest zeros
      [6H+8  : 6H+16) rows: b0, b1, b2 (= b_ih + b_hh), out_b padded, zeros
    """
    assert H % 8 == 0, "H must be a multiple of 8 for aligned sublane slices"
    assert n_features <= H
    H4 = 4 * H
    f32 = jnp.float32
    T = lambda a: jnp.asarray(a, f32).T

    out_wT = jnp.zeros((H, H4), f32).at[:, :n_features].set(T(params["out_w"]))
    x_block = jnp.zeros((8, H4), f32).at[0:1, :].set(T(params["wih0"]))

    def bias(l):
        return (params[f"bih{l}"] + params[f"bhh{l}"]).astype(f32).reshape(1, H4)

    out_b = jnp.zeros((1, H4), f32).at[0, :n_features].set(
        jnp.asarray(params["out_b"], f32))
    bias_block = jnp.concatenate(
        [bias(0), bias(1), bias(2), out_b, jnp.zeros((4, H4), f32)], axis=0)

    return jnp.concatenate(
        [T(params["whh0"]),
         T(params["wih1"]), T(params["whh1"]),
         T(params["wih2"]), T(params["whh2"]),
         out_wT, x_block, bias_block], axis=0)          # (6H+16, 4H)


@partial(jax.jit, static_argnames=("n_features",))
def decoder_forward(wb, x, input_hidden, input_cell, *, n_features=1):
    """x: (1,1,1); input_hidden/cell: (3,1,H).  Returns (y, h_n, c_n) with
    shapes ((1,1,nf), (3,1,H), (3,1,H)) matching the PyTorch module."""
    H = input_hidden.shape[-1]
    assert H % 8 == 0

    x_s = x.reshape(1, 1).astype(jnp.float32)
    state = jnp.zeros((8, H), jnp.float32)
    state = state.at[0:3, :].set(input_hidden.reshape(3, H).astype(jnp.float32))
    state = state.at[3:6, :].set(input_cell.reshape(3, H).astype(jnp.float32))

    out = pl.pallas_call(
        decoder_kernel,
        out_shape=jax.ShapeDtypeStruct((8, H), jnp.float32),
        in_specs=[
            pl.BlockSpec(memory_space=pltpu.MemorySpace.SMEM),   # x scalar
            pl.BlockSpec(memory_space=pltpu.MemorySpace.VMEM),   # state slab
            pl.BlockSpec(memory_space=pltpu.MemorySpace.VMEM),   # weight slab
        ],
        out_specs=pl.BlockSpec(memory_space=pltpu.MemorySpace.VMEM),
    )(x_s, state, wb)

    hidden_n = out[0:3, :].reshape(3, 1, H)
    cell_n = out[3:6, :].reshape(3, 1, H)
    y = out[6:7, 0:n_features].reshape(1, 1, n_features)
    return y, hidden_n, cell_n


def decoder_reference(params, x, input_hidden, input_cell):
    """Pure-JAX reference of the PyTorch forward (eval mode)."""
    H = input_hidden.shape[-1]
    layer_in = x.reshape(1, 1).astype(jnp.float32)
    h = input_hidden.reshape(3, H).astype(jnp.float32)
    c = input_cell.reshape(3, H).astype(jnp.float32)
    hs, cs = [], []
    for l in range(3):
        gates = (layer_in @ params[f"wih{l}"].T + params[f"bih{l}"]
                 + h[l:l + 1] @ params[f"whh{l}"].T + params[f"bhh{l}"])
        i_g = jax.nn.sigmoid(gates[:, 0:H])
        f_g = jax.nn.sigmoid(gates[:, H:2 * H])
        g_g = jnp.tanh(gates[:, 2 * H:3 * H])
        o_g = jax.nn.sigmoid(gates[:, 3 * H:4 * H])
        c_new = f_g * c[l:l + 1] + i_g * g_g
        h_new = o_g * jnp.tanh(c_new)
        hs.append(h_new)
        cs.append(c_new)
        layer_in = h_new                                  # dropout identity (eval)
    y = layer_in @ params["out_w"].T + params["out_b"]
    return (y.reshape(1, 1, -1),
            jnp.stack(hs, 0).reshape(3, 1, H),
            jnp.stack(cs, 0).reshape(3, 1, H))


if __name__ == "__main__":
    key = jax.random.PRNGKey(0)
    H = 32             # hidden_dim (small test size; 4H = 128 lanes = 1 vreg row)
    n_features = 1

    kp, kx, kh, kc = jax.random.split(key, 4)
    params = init_params(kp, H, n_features)
    wb = pack_weights(params, H, n_features)              # packed once, reused

    x = jax.random.normal(kx, (1, 1, 1), jnp.float32)
    input_hidden = jax.random.normal(kh, (3, 1, H), jnp.float32)
    input_cell = jax.random.normal(kc, (3, 1, H), jnp.float32)

    y, hidden_n, cell_n = decoder_forward(
        wb, x, input_hidden, input_cell, n_features=n_features)
    jax.block_until_ready((y, hidden_n, cell_n))

    y_r, h_r, c_r = decoder_reference(params, x, input_hidden, input_cell)
    assert y.shape == (1, 1, n_features)
    assert hidden_n.shape == (3, 1, H)
    assert cell_n.shape == (3, 1, H)
    assert jnp.allclose(y, y_r, rtol=1e-3, atol=1e-3)
    assert jnp.allclose(hidden_n, h_r, rtol=1e-3, atol=1e-3)
    assert jnp.allclose(cell_n, c_r, rtol=1e-3, atol=1e-3)
    print("KERNEL_OK")
</pallas_src>

<mosaic_0001>
module attributes {stable_mosaic.version = 11 : i64} {
  func.func @decoder_kernel(%arg0: memref<1x1xf32, #tpu.memory_space<smem>>, %arg1: memref<8x32xf32, #tpu.memory_space<vmem>>, %arg2: memref<208x128xf32, #tpu.memory_space<vmem>>, %arg3: memref<8x32xf32, #tpu.memory_space<vmem>>) attributes {dimension_semantics = [], scalar_prefetch = 0 : i64, scratch_operands = 0 : i64, tpu.core_type = #tpu.core_type<tc>} {
    %c0 = arith.constant 0 : index
    %c0_0 = arith.constant 0 : index
    %0 = memref.load %arg0[%c0, %c0_0] : memref<1x1xf32, #tpu.memory_space<smem>>
    %c0_1 = arith.constant 0 : index
    %c0_2 = arith.constant 0 : index
    %1 = vector.load %arg1[%c0_1, %c0_2] : memref<8x32xf32, #tpu.memory_space<vmem>>, vector<8x32xf32>
    %c200 = arith.constant 200 : index
    %c0_3 = arith.constant 0 : index
    %2 = vector.load %arg2[%c200, %c0_3] : memref<208x128xf32, #tpu.memory_space<vmem>>, vector<8x128xf32>
    %3 = vector.extract_strided_slice %1 {offsets = [0, 0], sizes = [1, 32], strides = [1, 1]} : vector<8x32xf32> to vector<1x32xf32>
    %4 = vector.extract_strided_slice %1 {offsets = [3, 0], sizes = [1, 32], strides = [1, 1]} : vector<8x32xf32> to vector<1x32xf32>
    %c192 = arith.constant 192 : index
    %c0_4 = arith.constant 0 : index
    %5 = vector.load %arg2[%c192, %c0_4] : memref<208x128xf32, #tpu.memory_space<vmem>>, vector<1x128xf32>
    %6 = vector.broadcast %0 : f32 to vector<1x128xf32>
    %7 = arith.mulf %6, %5 : vector<1x128xf32>
    %c0_5 = arith.constant 0 : index
    %c0_6 = arith.constant 0 : index
    %8 = vector.load %arg2[%c0_5, %c0_6] : memref<208x128xf32, #tpu.memory_space<vmem>>, vector<32x128xf32>
    %cst = arith.constant dense<0.000000e+00> : vector<1x128xf32>
    %9 = tpu.matmul %3, %8, %cst {dimension_numbers = #tpu.dot_dimension_numbers<[1], [0], [0], [1], [0, 0, 1, 1], [], []>} : vector<1x32xf32>, vector<32x128xf32>, vector<1x128xf32> -> vector<1x128xf32>
    %10 = arith.addf %7, %9 : vector<1x128xf32>
    %11 = vector.extract_strided_slice %2 {offsets = [0, 0], sizes = [1, 128], strides = [1, 1]} : vector<8x128xf32> to vector<1x128xf32>
    %12 = arith.addf %10, %11 : vector<1x128xf32>
    %13 = arith.negf %12 : vector<1x128xf32>
    %14 = math.exp %13 : vector<1x128xf32>
    %cst_7 = arith.constant 1.000000e+00 : f32
    %15 = vector.broadcast %cst_7 : f32 to vector<1x128xf32>
    %16 = arith.addf %15, %14 : vector<1x128xf32>
    %17 = arith.divf %15, %16 : vector<1x128xf32>
    %18 = math.tanh %12 : vector<1x128xf32>
    %19 = vector.extract_strided_slice %17 {offsets = [0, 0], sizes = [1, 32], strides = [1, 1]} : vector<1x128xf32> to vector<1x32xf32>
    %20 = vector.extract_strided_slice %17 {offsets = [0, 32], sizes = [1, 32], strides = [1, 1]} : vector<1x128xf32> to vector<1x32xf32>
    %21 = vector.extract_strided_slice %18 {offsets = [0, 64], sizes = [1, 32], strides = [1, 1]} : vector<1x128xf32> to vector<1x32xf32>
    %22 = vector.extract_strided_slice %17 {offsets = [0, 96], sizes = [1, 32], strides = [1, 1]} : vector<1x128xf32> to vector<1x32xf32>
    %23 = arith.mulf %20, %4 : vector<1x32xf32>
    %24 = arith.mulf %19, %21 : vector<1x32xf32>
    %25 = arith.addf %23, %24 : vector<1x32xf32>
    %26 = math.tanh %25 : vector<1x32xf32>
    %27 = arith.mulf %22, %26 : vector<1x32xf32>
    %28 = vector.extract_strided_slice %1 {offsets = [1, 0], sizes = [1, 32], strides = [1, 1]} : vector<8x32xf32> to vector<1x32xf32>
    %29 = vector.extract_strided_slice %1 {offsets = [4, 0], sizes = [1, 32], strides = [1, 1]} : vector<8x32xf32> to vector<1x32xf32>
    %30 = tpu.concatenate %27, %28 in 1 : vector<1x32xf32>, vector<1x32xf32> -> vector<1x64xf32>
    %c32 = arith.constant 32 : index
    %c0_8 = arith.constant 0 : index
    %31 = vector.load %arg2[%c32, %c0_8] : memref<208x128xf32, #tpu.memory_space<vmem>>, vector<64x128xf32>
    %cst_9 = arith.constant dense<0.000000e+00> : vector<1x128xf32>
    %32 = tpu.matmul %30, %31, %cst_9 {dimension_numbers = #tpu.dot_dimension_numbers<[1], [0], [0], [1], [0, 0, 1, 1], [], []>} : vector<1x64xf32>, vector<64x128xf32>, vector<1x128xf32> -> vector<1x128xf32>
    %33 = vector.extract_strided_slice %2 {offsets = [1, 0], sizes = [1, 128], strides = [1, 1]} : vector<8x128xf32> to vector<1x128xf32>
    %34 = arith.addf %32, %33 : vector<1x128xf32>
    %35 = arith.negf %34 : vector<1x128xf32>
    %36 = math.exp %35 : vector<1x128xf32>
    %cst_10 = arith.constant 1.000000e+00 : f32
    %37 = vector.broadcast %cst_10 : f32 to vector<1x128xf32>
    %38 = arith.addf %37, %36 : vector<1x128xf32>
    %39 = arith.divf %37, %38 : vector<1x128xf32>
    %40 = math.tanh %34 : vector<1x128xf32>
    %41 = vector.extract_strided_slice %39 {offsets = [0, 0], sizes = [1, 32], strides = [1, 1]} : vector<1x128xf32> to vector<1x32xf32>
    %42 = vector.extract_strided_slice %39 {offsets = [0, 32], sizes = [1, 32], strides = [1, 1]} : vector<1x128xf32> to vector<1x32xf32>
    %43 = vector.extract_strided_slice %40 {offsets = [0, 64], sizes = [1, 32], strides = [1, 1]} : vector<1x128xf32> to vector<1x32xf32>
    %44 = vector.extract_strided_slice %39 {offsets = [0, 96], sizes = [1, 32], strides = [1, 1]} : vector<1x128xf32> to vector<1x32xf32>
    %45 = arith.mulf %42, %29 : vector<1x32xf32>
    %46 = arith.mulf %41, %43 : vector<1x32xf32>
    %47 = arith.addf %45, %46 : vector<1x32xf32>
    %48 = math.tanh %47 : vector<1x32xf32>
    %49 = arith.mulf %44, %48 : vector<1x32xf32>
    %50 = vector.extract_strided_slice %1 {offsets = [2, 0], sizes = [1, 32], strides = [1, 1]} : vector<8x32xf32> to vector<1x32xf32>
    %51 = vector.extract_strided_slice %1 {offsets = [5, 0], sizes = [1, 32], strides = [1, 1]} : vector<8x32xf32> to vector<1x32xf32>
    %52 = tpu.concatenate %49, %50 in 1 : vector<1x32xf32>, vector<1x32xf32> -> vector<1x64xf32>
    %c96 = arith.constant 96 : index
    %c0_11 = arith.constant 0 : index
    %53 = vector.load %arg2[%c96, %c0_11] : memref<208x128xf32, #tpu.memory_space<vmem>>, vector<64x128xf32>
    %cst_12 = arith.constant dense<0.000000e+00> : vector<1x128xf32>
    %54 = tpu.matmul %52, %53, %cst_12 {dimension_numbers = #tpu.dot_dimension_numbers<[1], [0], [0], [1], [0, 0, 1, 1], [], []>} : vector<1x64xf32>, vector<64x128xf32>, vector<1x128xf32> -> vector<1x128xf32>
    %55 = vector.extract_strided_slice %2 {offsets = [2, 0], sizes = [1, 128], strides = [1, 1]} : vector<8x128xf32> to vector<1x128xf32>
    %56 = arith.addf %54, %55 : vector<1x128xf32>
    %57 = arith.negf %56 : vector<1x128xf32>
    %58 = math.exp %57 : vector<1x128xf32>
    %cst_13 = arith.constant 1.000000e+00 : f32
    %59 = vector.broadcast %cst_13 : f32 to vector<1x128xf32>
    %60 = arith.addf %59, %58 : vector<1x128xf32>
    %61 = arith.divf %59, %60 : vector<1x128xf32>
    %62 = math.tanh %56 : vector<1x128xf32>
    %63 = vector.extract_strided_slice %61 {offsets = [0, 0], sizes = [1, 32], strides = [1, 1]} : vector<1x128xf32> to vector<1x32xf32>
    %64 = vector.extract_strided_slice %61 {offsets = [0, 32], sizes = [1, 32], strides = [1, 1]} : vector<1x128xf32> to vector<1x32xf32>
    %65 = vector.extract_strided_slice %62 {offsets = [0, 64], sizes = [1, 32], strides = [1, 1]} : vector<1x128xf32> to vector<1x32xf32>
    %66 = vector.extract_strided_slice %61 {offsets = [0, 96], sizes = [1, 32], strides = [1, 1]} : vector<1x128xf32> to vector<1x32xf32>
    %67 = arith.mulf %64, %51 : vector<1x32xf32>
    %68 = arith.mulf %63, %65 : vector<1x32xf32>
    %69 = arith.addf %67, %68 : vector<1x32xf32>
    %70 = math.tanh %69 : vector<1x32xf32>
    %71 = arith.mulf %66, %70 : vector<1x32xf32>
    %c160 = arith.constant 160 : index
    %c0_14 = arith.constant 0 : index
    %72 = vector.load %arg2[%c160, %c0_14] : memref<208x128xf32, #tpu.memory_space<vmem>>, vector<32x128xf32>
    %cst_15 = arith.constant dense<0.000000e+00> : vector<1x128xf32>
    %73 = tpu.matmul %71, %72, %cst_15 {dimension_numbers = #tpu.dot_dimension_numbers<[1], [0], [0], [1], [0, 0, 1, 1], [], []>} : vector<1x32xf32>, vector<32x128xf32>, vector<1x128xf32> -> vector<1x128xf32>
    %74 = vector.extract_strided_slice %2 {offsets = [3, 0], sizes = [1, 128], strides = [1, 1]} : vector<8x128xf32> to vector<1x128xf32>
    %75 = arith.addf %73, %74 : vector<1x128xf32>
    %76 = vector.extract_strided_slice %75 {offsets = [0, 0], sizes = [1, 32], strides = [1, 1]} : vector<1x128xf32> to vector<1x32xf32>
    %cst_16 = arith.constant 0.000000e+00 : f32
    %77 = vector.broadcast %cst_16 : f32 to vector<1x32xf32>
    %78 = tpu.concatenate %27, %49, %71, %25, %47, %69, %76, %77 in 0 : vector<1x32xf32>, vector<1x32xf32>, vector<1x32xf32>, vector<1x32xf32>, vector<1x32xf32>, vector<1x32xf32>, vector<1x32xf32>, vector<1x32xf32> -> vector<8x32xf32>
    %c0_17 = arith.constant 0 : index
    %c0_18 = arith.constant 0 : index
    %79 = vector.load %arg3[%c0_17, %c0_18] : memref<8x32xf32, #tpu.memory_space<vmem>>, vector<8x32xf32>
    tpu.vector_store %arg3[%c0_17, %c0_18], %78 {strides = array<i32>} : memref<8x32xf32, #tpu.memory_space<vmem>>, vector<8x32xf32>,
    return
  }
}

</mosaic_0001>

<llo_original>
// kernel: decoder_forward.1
$region0: #{decoder_forward.1}
  #allocation0 [shape = 'u32[]', space=smem, size = 0x4, offset = 0x4, fixed_abs, tag = 'smem constant byte address 0x4 - core index']
  #allocation1 [shape = 'u32[144,128]{1,0:T(1,128)}', space=vmem, size = 0x12000, scoped, tag = 'internal scratch']
  #allocation2 [shape = 'f32[1,1]{1,0:T(1,128)S(6)}', space=smem, size = 0x200, scoped, tag = 'scoped memory for decoder_forward.1']
  %s0 = inlined_call_operand.<no memory space> [shape: f32[1,1], index: 0, kind: input, shape index: {}]
  %s1 = inlined_call_operand.vmem [shape: f32[8,32], index: 1, kind: input, shape index: {}]
  %s2 = inlined_call_operand.hbm [shape: f32[208,128], index: 2, kind: input, shape index: {}]
  %s3 = inlined_call_operand.vmem [shape: f32[8,32], index: 3, kind: output, shape index: {}]
  %s4 = sld [smem:[#allocation0]]
  $region26: #{decoder_forward.1} parent=0
    _
  %s6 = ssub.s32 1, %s4
  %s7 = scalar_select 0, %s6, %s4
  %8 = sst [smem:[#allocation2]] %s0
  $region1: #{decoder_forward.1} parent=0
    #allocation3 [shape = 'u8[106496]{0}', space=vmem, size = 0x1a000, scoped, tag = 'input window, operand 2, single buffered']
    #allocation4 [shape = 's32[1]{0}', space=sflag, size = 0x4, scoped, tag = 'scoped memory for decoder_forward.1']
    %9 = vsyncpa [#allocation4], 0
    // Predicated region
    $region2: #{decoder_forward.1} parent=1 // pred_check
      _
    $region3: #{decoder_forward.1} parent=1 // pred_check_branch
      %11 = sbr.rel (0) target = $region5
    $region4: #{decoder_forward.1} parent=1 // pred_region
      _
    $region5: #{decoder_forward.1} parent=1 // pred_fallthru
      _
    // Predicated region
    $region6: #{decoder_forward.1} parent=1 // pred_check
      _
    $region7: #{decoder_forward.1} parent=1 // pred_check_branch
      %13 = sbr.rel (0) target = $region9
    $region8: #{decoder_forward.1} parent=1 // pred_region
      _
    $region9: #{decoder_forward.1} parent=1 // pred_fallthru
      _
    // Predicated region
    $region10: #{decoder_forward.1} parent=1 // pred_check
      _
    $region11: #{decoder_forward.1} parent=1 // pred_check_branch
      %15 = sbr.rel (0) target = $region13
    $region12: #{decoder_forward.1} parent=1 // pred_region
      %s17 = ssub.s32 3328, 3328
      %18 = vsyncadd [#allocation4], %s17
      %s19 = sshll.u32 [#allocation3], 4
      %s20 = int_to_ptr.vmem [resolvable:$true] %s19
      %25 = dma.hbm_to_vmem [thread:$0]  %s2, 3328, %s20, [#allocation4], 128, 128, 8
    $region13: #{decoder_forward.1} parent=1 // pred_fallthru
      _
    // Predicated region
    $region14: #{decoder_forward.1} parent=1 // pred_check
      _
    $region15: #{decoder_forward.1} parent=1 // pred_check_branch
      %27 = sbr.rel (0) target = $region17
    $region16: #{decoder_forward.1} parent=1 // pred_region
      %28 = dma.done [#allocation4], 3328
    $region17: #{decoder_forward.1} parent=1 // pred_fallthru
      _
    %s29 = sld [smem:[#allocation2]]
    %v30 = vld [vmem:[%s1] sm:$0xff]
    %v31 = vld [vmem:[#allocation3 + $0xc8] sm:$0xff]
    %v32 = vld [vmem:[#allocation3 + $0xc0] sm:$0x1]
    %v33 = vstv %s29
    %v34 = vmul.f32 %v33, %v32
    %v35 = vld [vmem:[#allocation3] sm:$0xff]
    %v36 = vld [vmem:[#allocation3 + $0x8] sm:$0xff]
    %v37 = vld [vmem:[#allocation3 + $0x10] sm:$0xff]
    %v38 = vld [vmem:[#allocation3 + $0x18] sm:$0xff]
    %vm39 = vcmask 261120
    %v41 = vsel %vm39, %v30, 0
    %43 = vmatprep.subr.mxu0 0.0
    %44 = vmatpush1.msra.mxu0 0.0
    %45 = vmatprep.subr.mxu0 0.0
    %46 = vmatpush1.msra.mxu0 0.0
    %47 = vmatprep.subr.mxu0 0.0
    %48 = vmatpush1.msra.mxu0 0.0
    %49 = vmatprep.subr.mxu0 0.0
    %50 = vmatpush1.msra.mxu0 0.0
    %51 = vmatprep.subr.mxu0 0.0
    %52 = vmatpush1.msra.mxu0 0.0
    %53 = vmatprep.subr.mxu0 0.0
    %54 = vmatpush1.msra.mxu0 0.0
    %55 = vmatprep.subr.mxu0 0.0
    %56 = vmatpush1.msra.mxu0 0.0
    %57 = vmatprep.subr.mxu0 0.0
    %58 = vmatpush1.msra.mxu0 0.0
    %59 = vmatprep.subr.mxu0 0.0
    %60 = vmatpush1.msra.mxu0 0.0
    %61 = vmatprep.subr.mxu0 0.0
    %62 = vmatpush1.msra.mxu0 0.0
    %63 = vmatprep.subr.mxu0 0.0
    %64 = vmatpush1.msra.mxu0 0.0
    %65 = vmatprep.subr.mxu0 0.0
    %66 = vmatpush1.msra.mxu0 0.0
    %67 = vmatprep.subr.mxu0 0.0
    %68 = vmatpush1.msra.mxu0 %v38
    %69 = vmatprep.subr.mxu0 0.0
    %70 = vmatpush1.msra.mxu0 %v37
    %71 = vmatprep.subr.mxu0 0.0
    %72 = vmatpush1.msra.mxu0 %v36
    %73 = vmatprep.subr.mxu0 0.0
    %74 = vmatpush1.msra.mxu0 %v35
    %75 = vmatprep.subr.mxu0 0.0
    %76 = vmatpush2.msra.mxu0 0.0
    %77 = vmatprep.subr.mxu0 0.0
    %78 = vmatpush2.msra.mxu0 0.0
    %79 = vmatprep.subr.mxu0 0.0
    %80 = vmatpush2.msra.mxu0 0.0
    %81 = vmatprep.subr.mxu0 0.0
    %82 = vmatpush2.msra.mxu0 0.0
    %83 = vmatprep.subr.mxu0 0.0
    %84 = vmatpush2.msra.mxu0 0.0
    %85 = vmatprep.subr.mxu0 0.0
    %86 = vmatpush2.msra.mxu0 0.0
    %87 = vmatprep.subr.mxu0 0.0
    %88 = vmatpush2.msra.mxu0 0.0
    %89 = vmatprep.subr.mxu0 0.0
    %90 = vmatpush2.msra.mxu0 0.0
    %91 = vmatprep.subr.mxu0 0.0
    %92 = vmatpush2.msra.mxu0 0.0
    %93 = vmatprep.subr.mxu0 0.0
    %94 = vmatpush2.msra.mxu0 0.0
    %95 = vmatprep.subr.mxu0 0.0
    %96 = vmatpush2.msra.mxu0 0.0
    %97 = vmatprep.subr.mxu0 0.0
    %98 = vmatpush2.msra.mxu0 0.0
    %99 = vmatprep.subr.mxu0 0.0
    %100 = vmatpush2.msra.mxu0 0.0
    %101 = vmatprep.subr.mxu0 0.0
    %102 = vmatpush2.msra.mxu0 0.0
    %103 = vmatprep.subr.mxu0 0.0
    %104 = vmatpush2.msra.mxu0 0.0
    %105 = vmatprep.subr.mxu0 0.0
    %106 = vmatpush2.msra.mxu0 0.0
    %107 = vmatprep.mubr.f32.mxu0 0.0
    %108 = vmatmul.mubr.f32.gmra.mxu0 %v41
    %v109 = vpop.f32.mrf.mxu0
    %v110 = vadd.f32 0.0, %v109
    %v111 = vpop.f32.mrf.mxu0
    %112 = vdwg.mxu0
    %v113 = vadd.f32 %v34, %v110
    %v114 = vadd.f32 %v113, %v31
    %v115 = vxor.u32 %v114, 2147483648
    %v116 = vmul.f32 %v115, 1.442695
    %v117 = vpow.pop %v116
    %v118 = vadd.f32 %v117, 1.0
    %v119 = vrcp.pop %v118
    %v120 = vmul.f32 1.0, %v119
    %v121 = vtanh.pop %v114
    %v122 = vrot.slane %v30, 3
    %123 = vrot.lane.b32.xlu0 %v122, 32
    %v124 = vpop.permute.xlu0 %123
    %v126 = vmul.f32 %v120, %v124
    %128 = vrot.lane.b32.xlu0 %v121, 64
    %v129 = vpop.permute.xlu0 %128
    %v131 = vmul.f32 %v120, %v129
    %133 = vrot.lane.b32.xlu0 %v131, 32
    %v134 = vpop.permute.xlu0 %133
    %v136 = vadd.f32 %v126, %v134
    %v137 = vtanh.pop %v136
    %139 = vrot.lane.b32.xlu0 %v137, 64
    %v140 = vpop.permute.xlu0 %139
    %v142 = vmul.f32 %v120, %v140
    %144 = vrot.lane.b32.xlu0 %v142, 32
    %v145 = vpop.permute.xlu0 %144
    %v147 = vrot.slane %v30, 1
    %148 = vrot.lane.b32.xlu0 %v147, 32
    %v149 = vpop.permute.xlu0 %148
    %v151 = vsel %vm39, %v145, %v149
    %v152 = vld [vmem:[#allocation3 + $0x20] sm:$0xff]
    %v153 = vld [vmem:[#allocation3 + $0x28] sm:$0xff]
    %v154 = vld [vmem:[#allocation3 + $0x30] sm:$0xff]
    %v155 = vld [vmem:[#allocation3 + $0x38] sm:$0xff]
    %v156 = vld [vmem:[#allocation3 + $0x40] sm:$0xff]
    %v157 = vld [vmem:[#allocation3 + $0x48] sm:$0xff]
    %v158 = vld [vmem:[#allocation3 + $0x50] sm:$0xff]
    %v159 = vld [vmem:[#allocation3 + $0x58] sm:$0xff]
    %v161 = vrot.slane %v31, 1
    %vm163 = vcmask 523264
    %v165 = vsel %vm163, %v151, 0
    %167 = vmatprep.subr.mxu0 0.0
    %168 = vmatpush1.msra.mxu0 0.0
    %169 = vmatprep.subr.mxu0 0.0
    %170 = vmatpush1.msra.mxu0 0.0
    %171 = vmatprep.subr.mxu0 0.0
    %172 = vmatpush1.msra.mxu0 0.0
    %173 = vmatprep.subr.mxu0 0.0
    %174 = vmatpush1.msra.mxu0 0.0
    %175 = vmatprep.subr.mxu0 0.0
    %176 = vmatpush1.msra.mxu0 0.0
    %177 = vmatprep.subr.mxu0 0.0
    %178 = vmatpush1.msra.mxu0 0.0
    %179 = vmatprep.subr.mxu0 0.0
    %180 = vmatpush1.msra.mxu0 0.0
    %181 = vmatprep.subr.mxu0 0.0
    %182 = vmatpush1.msra.mxu0 0.0
    %183 = vmatprep.subr.mxu0 0.0
    %184 = vmatpush1.msra.mxu0 %v159
    %185 = vmatprep.subr.mxu0 0.0
    %186 = vmatpush1.msra.mxu0 %v158
    %187 = vmatprep.subr.mxu0 0.0
    %188 = vmatpush1.msra.mxu0 %v157
    %189 = vmatprep.subr.mxu0 0.0
    %190 = vmatpush1.msra.mxu0 %v156
    %191 = vmatprep.subr.mxu0 0.0
    %192 = vmatpush1.msra.mxu0 %v155
    %193 = vmatprep.subr.mxu0 0.0
    %194 = vmatpush1.msra.mxu0 %v154
    %195 = vmatprep.subr.mxu0 0.0
    %196 = vmatpush1.msra.mxu0 %v153
    %197 = vmatprep.subr.mxu0 0.0
    %198 = vmatpush1.msra.mxu0 %v152
    %199 = vmatprep.subr.mxu0 0.0
    %200 = vmatpush2.msra.mxu0 0.0
    %201 = vmatprep.subr.mxu0 0.0
    %202 = vmatpush2.msra.mxu0 0.0
    %203 = vmatprep.subr.mxu0 0.0
    %204 = vmatpush2.msra.mxu0 0.0
    %205 = vmatprep.subr.mxu0 0.0
    %206 = vmatpush2.msra.mxu0 0.0
    %207 = vmatprep.subr.mxu0 0.0
    %208 = vmatpush2.msra.mxu0 0.0
    %209 = vmatprep.subr.mxu0 0.0
    %210 = vmatpush2.msra.mxu0 0.0
    %211 = vmatprep.subr.mxu0 0.0
    %212 = vmatpush2.msra.mxu0 0.0
    %213 = vmatprep.subr.mxu0 0.0
    %214 = vmatpush2.msra.mxu0 0.0
    %215 = vmatprep.subr.mxu0 0.0
    %216 = vmatpush2.msra.mxu0 0.0
    %217 = vmatprep.subr.mxu0 0.0
    %218 = vmatpush2.msra.mxu0 0.0
    %219 = vmatprep.subr.mxu0 0.0
    %220 = vmatpush2.msra.mxu0 0.0
    %221 = vmatprep.subr.mxu0 0.0
    %222 = vmatpush2.msra.mxu0 0.0
    %223 = vmatprep.subr.mxu0 0.0
    %224 = vmatpush2.msra.mxu0 0.0
    %225 = vmatprep.subr.mxu0 0.0
    %226 = vmatpush2.msra.mxu0 0.0
    %227 = vmatprep.subr.mxu0 0.0
    %228 = vmatpush2.msra.mxu0 0.0
    %229 = vmatprep.subr.mxu0 0.0
    %230 = vmatpush2.msra.mxu0 0.0
    %231 = vmatprep.mubr.f32.mxu0 0.0
    %232 = vmatmul.mubr.f32.gmra.mxu0 %v165
    %v233 = vpop.f32.mrf.mxu0
    %v234 = vadd.f32 %v161, %v233
    %v235 = vpop.f32.mrf.mxu0
    %236 = vdwg.mxu0
    %v237 = vxor.u32 %v234, 2147483648
    %v238 = vmul.f32 %v237, 1.442695
    %v239 = vpow.pop %v238
    %v240 = vadd.f32 %v239, 1.0
    %v241 = vrcp.pop %v240
    %v242 = vmul.f32 1.0, %v241
    %v243 = vtanh.pop %v234
    %v244 = vrot.slane %v30, 4
    %245 = vrot.lane.b32.xlu0 %v244, 32
    %v246 = vpop.permute.xlu0 %245
    %v248 = vmul.f32 %v242, %v246
    %250 = vrot.lane.b32.xlu0 %v243, 64
    %v251 = vpop.permute.xlu0 %250
    %v253 = vmul.f32 %v242, %v251
    %255 = vrot.lane.b32.xlu0 %v253, 32
    %v256 = vpop.permute.xlu0 %255
    %v258 = vadd.f32 %v248, %v256
    %v259 = vtanh.pop %v258
    %261 = vrot.lane.b32.xlu0 %v259, 64
    %v262 = vpop.permute.xlu0 %261
    %v264 = vmul.f32 %v242, %v262
    %266 = vrot.lane.b32.xlu0 %v264, 32
    %v267 = vpop.permute.xlu0 %266
    %v269 = vrot.slane %v30, 2
    %270 = vrot.lane.b32.xlu0 %v269, 32
    %v271 = vpop.permute.xlu0 %270
    %v273 = vsel %vm39, %v267, %v271
    %v274 = vld [vmem:[#allocation3 + $0x60] sm:$0xff]
    %v275 = vld [vmem:[#allocation3 + $0x68] sm:$0xff]
    %v276 = vld [vmem:[#allocation3 + $0x70] sm:$0xff]
    %v277 = vld [vmem:[#allocation3 + $0x78] sm:$0xff]
    %v278 = vld [vmem:[#allocation3 + $0x80] sm:$0xff]
    %v279 = vld [vmem:[#allocation3 + $0x88] sm:$0xff]
    %v280 = vld [vmem:[#allocation3 + $0x90] sm:$0xff]
    %v281 = vld [vmem:[#allocation3 + $0x98] sm:$0xff]
    %v282 = vrot.slane %v31, 2
    %v285 = vsel %vm163, %v273, 0
    %287 = vmatprep.subr.mxu0 0.0
    %288 = vmatpush1.msra.mxu0 0.0
    %289 = vmatprep.subr.mxu0 0.0
    %290 = vmatpush1.msra.mxu0 0.0
    %291 = vmatprep.subr.mxu0 0.0
    %292 = vmatpush1.msra.mxu0 0.0
    %293 = vmatprep.subr.mxu0 0.0
    %294 = vmatpush1.msra.mxu0 0.0
    %295 = vmatprep.subr.mxu0 0.0
    %296 = vmatpush1.msra.mxu0 0.0
    %297 = vmatprep.subr.mxu0 0.0
    %298 = vmatpush1.msra.mxu0 0.0
    %299 = vmatprep.subr.mxu0 0.0
    %300 = vmatpush1.msra.mxu0 0.0
    %301 = vmatprep.subr.mxu0 0.0
    %302 = vmatpush1.msra.mxu0 0.0
    %303 = vmatprep.subr.mxu0 0.0
    %304 = vmatpush1.msra.mxu0 %v281
    %305 = vmatprep.subr.mxu0 0.0
    %306 = vmatpush1.msra.mxu0 %v280
    %307 = vmatprep.subr.mxu0 0.0
    %308 = vmatpush1.msra.mxu0 %v279
    %309 = vmatprep.subr.mxu0 0.0
    %310 = vmatpush1.msra.mxu0 %v278
    %311 = vmatprep.subr.mxu0 0.0
    %312 = vmatpush1.msra.mxu0 %v277
    %313 = vmatprep.subr.mxu0 0.0
    %314 = vmatpush1.msra.mxu0 %v276
    %315 = vmatprep.subr.mxu0 0.0
    %316 = vmatpush1.msra.mxu0 %v275
    %317 = vmatprep.subr.mxu0 0.0
    %318 = vmatpush1.msra.mxu0 %v274
    %319 = vmatprep.subr.mxu0 0.0
    %320 = vmatpush2.msra.mxu0 0.0
    %321 = vmatprep.subr.mxu0 0.0
    %322 = vmatpush2.msra.mxu0 0.0
    %323 = vmatprep.subr.mxu0 0.0
    %324 = vmatpush2.msra.mxu0 0.0
    %325 = vmatprep.subr.mxu0 0.0
    %326 = vmatpush2.msra.mxu0 0.0
    %327 = vmatprep.subr.mxu0 0.0
    %328 = vmatpush2.msra.mxu0 0.0
    %329 = vmatprep.subr.mxu0 0.0
    %330 = vmatpush2.msra.mxu0 0.0
    %331 = vmatprep.subr.mxu0 0.0
    %332 = vmatpush2.msra.mxu0 0.0
    %333 = vmatprep.subr.mxu0 0.0
    %334 = vmatpush2.msra.mxu0 0.0
    %335 = vmatprep.subr.mxu0 0.0
    %336 = vmatpush2.msra.mxu0 0.0
    %337 = vmatprep.subr.mxu0 0.0
    %338 = vmatpush2.msra.mxu0 0.0
    %339 = vmatprep.subr.mxu0 0.0
    %340 = vmatpush2.msra.mxu0 0.0
    %341 = vmatprep.subr.mxu0 0.0
    %342 = vmatpush2.msra.mxu0 0.0
    %343 = vmatprep.subr.mxu0 0.0
    %344 = vmatpush2.msra.mxu0 0.0
    %345 = vmatprep.subr.mxu0 0.0
    %346 = vmatpush2.msra.mxu0 0.0
    %347 = vmatprep.subr.mxu0 0.0
    %348 = vmatpush2.msra.mxu0 0.0
    %349 = vmatprep.subr.mxu0 0.0
    %350 = vmatpush2.msra.mxu0 0.0
    %351 = vmatprep.mubr.f32.mxu0 0.0
    %352 = vmatmul.mubr.f32.gmra.mxu0 %v285
    %v353 = vpop.f32.mrf.mxu0
    %v354 = vadd.f32 %v282, %v353
    %v355 = vpop.f32.mrf.mxu0
    %356 = vdwg.mxu0
    %v357 = vxor.u32 %v354, 2147483648
    %v358 = vmul.f32 %v357, 1.442695
    %v359 = vpow.pop %v358
    %v360 = vadd.f32 %v359, 1.0
    %v361 = vrcp.pop %v360
    %v362 = vmul.f32 1.0, %v361
    %v363 = vtanh.pop %v354
    %v364 = vrot.slane %v30, 5
    %365 = vrot.lane.b32.xlu0 %v364, 32
    %v366 = vpop.permute.xlu0 %365
    %v368 = vmul.f32 %v362, %v366
    %370 = vrot.lane.b32.xlu0 %v363, 64
    %v371 = vpop.permute.xlu0 %370
    %v373 = vmul.f32 %v362, %v371
    %375 = vrot.lane.b32.xlu0 %v373, 32
    %v376 = vpop.permute.xlu0 %375
    %v378 = vadd.f32 %v368, %v376
    %v379 = vtanh.pop %v378
    %381 = vrot.lane.b32.xlu0 %v379, 64
    %v382 = vpop.permute.xlu0 %381
    %v384 = vmul.f32 %v362, %v382
    %v385 = vld [vmem:[#allocation3 + $0xa0] sm:$0xff]
    %v386 = vld [vmem:[#allocation3 + $0xa8] sm:$0xff]
    %v387 = vld [vmem:[#allocation3 + $0xb0] sm:$0xff]
    %v388 = vld [vmem:[#allocation3 + $0xb8] sm:$0xff]
    %390 = vrot.lane.b32.xlu0 %v384, 32
    %v391 = vpop.permute.xlu0 %390
    %v392 = vrot.slane %v31, 3
    %v394 = vsel %vm39, %v391, 0
    %396 = vmatprep.subr.mxu0 0.0
    %397 = vmatpush1.msra.mxu0 0.0
    %398 = vmatprep.subr.mxu0 0.0
    %399 = vmatpush1.msra.mxu0 0.0
    %400 = vmatprep.subr.mxu0 0.0
    %401 = vmatpush1.msra.mxu0 0.0
    %402 = vmatprep.subr.mxu0 0.0
    %403 = vmatpush1.msra.mxu0 0.0
    %404 = vmatprep.subr.mxu0 0.0
    %405 = vmatpush1.msra.mxu0 0.0
    %406 = vmatprep.subr.mxu0 0.0
    %407 = vmatpush1.msra.mxu0 0.0
    %408 = vmatprep.subr.mxu0 0.0
    %409 = vmatpush1.msra.mxu0 0.0
    %410 = vmatprep.subr.mxu0 0.0
    %411 = vmatpush1.msra.mxu0 0.0
    %412 = vmatprep.subr.mxu0 0.0
    %413 = vmatpush1.msra.mxu0 0.0
    %414 = vmatprep.subr.mxu0 0.0
    %415 = vmatpush1.msra.mxu0 0.0
    %416 = vmatprep.subr.mxu0 0.0
    %417 = vmatpush1.msra.mxu0 0.0
    %418 = vmatprep.subr.mxu0 0.0
    %419 = vmatpush1.msra.mxu0 0.0
    %420 = vmatprep.subr.mxu0 0.0
    %421 = vmatpush1.msra.mxu0 %v388
    %422 = vmatprep.subr.mxu0 0.0
    %423 = vmatpush1.msra.mxu0 %v387
    %424 = vmatprep.subr.mxu0 0.0
    %425 = vmatpush1.msra.mxu0 %v386
    %426 = vmatprep.subr.mxu0 0.0
    %427 = vmatpush1.msra.mxu0 %v385
    %428 = vmatprep.subr.mxu0 0.0
    %429 = vmatpush2.msra.mxu0 0.0
    %430 = vmatprep.subr.mxu0 0.0
    %431 = vmatpush2.msra.mxu0 0.0
    %432 = vmatprep.subr.mxu0 0.0
    %433 = vmatpush2.msra.mxu0 0.0
    %434 = vmatprep.subr.mxu0 0.0
    %435 = vmatpush2.msra.mxu0 0.0
    %436 = vmatprep.subr.mxu0 0.0
    %437 = vmatpush2.msra.mxu0 0.0
    %438 = vmatprep.subr.mxu0 0.0
    %439 = vmatpush2.msra.mxu0 0.0
    %440 = vmatprep.subr.mxu0 0.0
    %441 = vmatpush2.msra.mxu0 0.0
    %442 = vmatprep.subr.mxu0 0.0
    %443 = vmatpush2.msra.mxu0 0.0
    %444 = vmatprep.subr.mxu0 0.0
    %445 = vmatpush2.msra.mxu0 0.0
    %446 = vmatprep.subr.mxu0 0.0
    %447 = vmatpush2.msra.mxu0 0.0
    %448 = vmatprep.subr.mxu0 0.0
    %449 = vmatpush2.msra.mxu0 0.0
    %450 = vmatprep.subr.mxu0 0.0
    %451 = vmatpush2.msra.mxu0 0.0
    %452 = vmatprep.subr.mxu0 0.0
    %453 = vmatpush2.msra.mxu0 0.0
    %454 = vmatprep.subr.mxu0 0.0
    %455 = vmatpush2.msra.mxu0 0.0
    %456 = vmatprep.subr.mxu0 0.0
    %457 = vmatpush2.msra.mxu0 0.0
    %458 = vmatprep.subr.mxu0 0.0
    %459 = vmatpush2.msra.mxu0 0.0
    %460 = vmatprep.mubr.f32.mxu0 0.0
    %461 = vmatmul.mubr.f32.gmra.mxu0 %v394
    %v462 = vpop.f32.mrf.mxu0
    %v463 = vadd.f32 %v392, %v462
    %v464 = vpop.f32.mrf.mxu0
    %465 = vdwg.mxu0
    %v466 = vrot.slane %v264, 7
    %v468 = vrot.slane %v384, 6
    %v471 = vrot.slane %v136, 5
    %472 = vrot.lane.b32.xlu0 %v471, 64
    %v473 = vpop.permute.xlu0 %472
    %v476 = vrot.slane %v258, 4
    %477 = vrot.lane.b32.xlu0 %v476, 64
    %v478 = vpop.permute.xlu0 %477
    %v481 = vrot.slane %v378, 3
    %482 = vrot.lane.b32.xlu0 %v481, 64
    %v483 = vpop.permute.xlu0 %482
    %v486 = vrot.slane %v463, 2
    %487 = vrot.lane.b32.xlu0 %v486, 96
    %v488 = vpop.permute.xlu0 %487
    %vm490 = vcmask 1040384
    %v491 = vsel %vm490, %v142, %v466
    %vm492 = vcmask 1041408
    %v493 = vsel %vm492, %v491, %v468
    %vm494 = vcmask 1042432
    %v495 = vsel %vm494, %v493, %v473
    %vm496 = vcmask 1043456
    %v497 = vsel %vm496, %v495, %v478
    %vm498 = vcmask 1044480
    %v499 = vsel %vm498, %v497, %v483
    %vm500 = vcmask 1045504
    %v501 = vsel %vm500, %v499, %v488
    %vm502 = vcmask 1046528
    %v503 = vsel %vm502, %v501, 0.0
    %505 = vrot.lane.b32.xlu0 %v503, 32
    %v506 = vpop.permute.xlu0 %505
    %508 = vst.msk [vmem:[%s3] sm:$0xff] %vm39, %v506
    // Predicated region
    $region18: #{decoder_forward.1} parent=1 // pred_check
      _
    $region19: #{decoder_forward.1} parent=1 // pred_check_branch
      %510 = sbr.rel (0) target = $region21
    $region20: #{decoder_forward.1} parent=1 // pred_region
      _
    $region21: #{decoder_forward.1} parent=1 // pred_fallthru
      _
    // Predicated region
    $region22: #{decoder_forward.1} parent=1 // pred_check
      _
    $region23: #{decoder_forward.1} parent=1 // pred_check_branch
      %512 = sbr.rel (0) target = $region25
    $region24: #{decoder_forward.1} parent=1 // pred_region
      _
    $region25: #{decoder_forward.1} parent=1 // pred_fallthru
      _
    %513 = vsyncpa [#allocation4], 1

</llo_original>
